<compile_context>
chip_gen: v5e
topology: v5e:2x2
jax: 0.10.0
libtpu: 0.0.40
codegen_flags: <defaults>
</compile_context>

<pallas_src>
import functools

import jax
import jax.numpy as jnp
from jax.experimental import pallas as pl
from jax.experimental.pallas import tpu as pltpu


def _l2_partial_kernel(o_ref, t_ref, out_ref, *, tile_rows, inner_blocks,
                       total_blocks, lane, last_rows, has_phantom):
    """Accumulate (8, 128) lane/sublane-parallel partial sums of (o - t)**2.

    Grid: (n_parallel, inner_blocks). For each parallel slice p the (8, 128)
    output block stays VMEM-resident across the inner reduction axis j.
    """
    p = pl.program_id(0)
    j = pl.program_id(1)
    block_idx = p * inner_blocks + j

    @pl.when(j == 0)
    def _():
        out_ref[...] = jnp.zeros_like(out_ref)

    def accumulate(valid_rows):
        # Cast inside the kernel (inputs may be bf16 etc.); no wrapper astype.
        d = o_ref[...].astype(jnp.float32) - t_ref[...].astype(jnp.float32)
        sq = d * d
        if valid_rows is not None:
            # Only the (single) partial last block pays iota/compare/select.
            row_ids = jax.lax.broadcasted_iota(jnp.int32, (tile_rows, lane), 0)
            sq = jnp.where(row_ids < valid_rows, sq, 0.0)
        # (tile_rows,128)->(tile_rows//8,8,128) is layout-preserving; the
        # axis-0 sum is plain vreg adds and the (8,128) store is unmasked.
        out_ref[...] += jnp.sum(sq.reshape(tile_rows // 8, 8, lane), axis=0)

    has_partial = last_rows != tile_rows       # static (trace time)
    n_full = total_blocks - 1 if has_partial else total_blocks

    if not has_partial and not has_phantom:
        accumulate(None)
    else:
        @pl.when(block_idx < n_full)
        def _():
            accumulate(None)

        if has_partial:
            @pl.when(block_idx == total_blocks - 1)
            def _():
                accumulate(last_rows)
        # Phantom blocks (block_idx >= total_blocks; clamped index_map reads)
        # contribute nothing.


def _sublane_granule(dtype):
    # Sub-32-bit dtypes pack along sublanes: 4B -> 8 rows, 2B -> 16, 1B -> 32.
    return {4: 8, 2: 16, 1: 32}.get(jnp.dtype(dtype).itemsize, 8)


def l2_loss(output, target, *, tile_rows=4096, n_parallel=1, fallback_rows=512,
            input_buffers=None, vmem_limit_bytes=None):
    """Pallas implementation of L2Loss.forward: sum((o - t)**2) / o.shape[0].

    On v7x pass n_parallel=2 (and optionally tile_rows=8192) so the leading
    "parallel" grid axis can be sharded across both TensorCores.
    """
    assert output.shape == target.shape, (output.shape, target.shape)
    batch = output.shape[0]
    lane = 128

    o = output.reshape(-1)
    t = target.reshape(-1)
    n = o.size

    granule = max(_sublane_granule(output.dtype), _sublane_granule(target.dtype))

    n_main = (n // lane) * lane
    rows = n_main // lane
    rem = n - n_main

    # Small inputs: launch + pipeline prologue dominate -> pure jnp fallback.
    if rows < max(granule, fallback_rows):
        d = o.astype(jnp.float32) - t.astype(jnp.float32)
        return jnp.sum(d * d) / jnp.float32(batch)

    # Ragged tail (< 128 elements): tiny jnp reduction; the kernel streams the
    # 128-aligned prefix. No full-array pad copy; when n % 128 == 0 the
    # reshape below is a free bitcast.
    tail = None
    if rem:
        d_tail = o[n_main:].astype(jnp.float32) - t[n_main:].astype(jnp.float32)
        tail = jnp.sum(d_tail * d_tail)
        o = o[:n_main]
        t = t[:n_main]
    o2 = o.reshape(rows, lane)
    t2 = t.reshape(rows, lane)

    # Biggest sublane-granule-aligned tile <= requested, <= rows.
    tr = min(int(tile_rows), rows)
    tr = max(granule, (tr // granule) * granule)

    total_blocks = pl.cdiv(rows, tr)
    n_par = max(1, min(int(n_parallel), total_blocks))
    inner_blocks = pl.cdiv(total_blocks, n_par)
    has_phantom = n_par * inner_blocks != total_blocks
    last_rows = rows - (total_blocks - 1) * tr

    if has_phantom:
        # Clamp logical blocks past the end onto the last real block; the
        # kernel skips their contribution entirely.
        def in_map(p, j):
            return (jnp.minimum(p * inner_blocks + j, total_blocks - 1), 0)
    else:
        def in_map(p, j):
            return (p * inner_blocks + j, 0)

    def make_in_spec():
        if input_buffers is not None:
            return pl.BlockSpec((tr, lane), in_map,
                                pipeline_mode=pl.Buffered(int(input_buffers)))
        return pl.BlockSpec((tr, lane), in_map)

    # Raise the scoped-VMEM limit only when big tiles actually need it.
    if vmem_limit_bytes is None:
        bufs = 2 if input_buffers is None else max(2, int(input_buffers))
        need = bufs * tr * lane * (o2.dtype.itemsize + t2.dtype.itemsize)
        need += n_par * 8 * lane * 4 + (2 << 20)
        if need > (12 << 20):
            vmem_limit_bytes = min(int(need * 3 // 2), 48 << 20)

    cp_kwargs = dict(dimension_semantics=("parallel", "arbitrary"))
    if vmem_limit_bytes is not None:
        cp_kwargs["vmem_limit_bytes"] = int(vmem_limit_bytes)

    kernel = functools.partial(
        _l2_partial_kernel,
        tile_rows=tr,
        inner_blocks=inner_blocks,
        total_blocks=total_blocks,
        lane=lane,
        last_rows=last_rows,
        has_phantom=has_phantom,
    )

    partials = pl.pallas_call(
        kernel,
        out_shape=jax.ShapeDtypeStruct((n_par * 8, lane), jnp.float32),
        grid_spec=pltpu.PrefetchScalarGridSpec(
            num_scalar_prefetch=0,
            grid=(n_par, inner_blocks),
            in_specs=[make_in_spec(), make_in_spec()],
            out_specs=pl.BlockSpec((8, lane), lambda p, j: (p, 0)),
        ),
        compiler_params=pltpu.CompilerParams(**cp_kwargs),
    )(o2, t2)

    total = jnp.sum(partials)          # tiny (n_par*8, 128) final reduce
    if tail is not None:
        total = total + tail
    return total / jnp.float32(batch)


if __name__ == "__main__":
    key = jax.random.PRNGKey(0)
    ks = jax.random.split(key, 10)

    def ref_loss(x, y):
        xf = x.astype(jnp.float32)
        yf = y.astype(jnp.float32)
        return jnp.sum((xf - yf) ** 2) / jnp.float32(x.shape[0])

    # 1) Small NCHW shape from the module; force the Pallas kernel path.
    x = jax.random.normal(ks[0], (2, 4, 16, 16), dtype=jnp.float32)
    y = jax.random.normal(ks[1], (2, 4, 16, 16), dtype=jnp.float32)
    out = l2_loss(x, y, fallback_rows=0)
    jax.block_until_ready(out)
    assert jnp.allclose(out, ref_loss(x, y), rtol=1e-5, atol=1e-5), (out, ref_loss(x, y))

    # 1b) Same shape via the small-input jnp fallback (default threshold).
    out_fb = l2_loss(x, y)
    jax.block_until_ready(out_fb)
    assert jnp.allclose(out_fb, ref_loss(x, y), rtol=1e-5, atol=1e-5)

    # 2) Ragged size (n % 128 != 0): exercises the tiny-tail path.
    x2 = jax.random.normal(ks[2], (2, 4, 130, 130), dtype=jnp.float32)
    y2 = jax.random.normal(ks[3], (2, 4, 130, 130), dtype=jnp.float32)
    out2 = l2_loss(x2, y2)
    jax.block_until_ready(out2)
    assert jnp.allclose(out2, ref_loss(x2, y2), rtol=1e-3, atol=1e-3)

    # 3) Multi-block + two parallel slices (v7x-style), evenly divisible grid.
    x3 = jax.random.normal(ks[4], (2, 4, 256, 256), dtype=jnp.float32)
    y3 = jax.random.normal(ks[5], (2, 4, 256, 256), dtype=jnp.float32)
    out3 = l2_loss(x3, y3, tile_rows=2048, n_parallel=2)
    jax.block_until_ready(out3)
    assert jnp.allclose(out3, ref_loss(x3, y3), rtol=1e-3, atol=1e-3)

    # 4) Partial last block + phantom block (non-divisible tiling): masked path.
    x4 = jax.random.normal(ks[6], (2, 4, 192, 256), dtype=jnp.float32)
    y4 = jax.random.normal(ks[7], (2, 4, 192, 256), dtype=jnp.float32)
    out4 = l2_loss(x4, y4, tile_rows=1280, n_parallel=2)
    jax.block_until_ready(out4)
    assert jnp.allclose(out4, ref_loss(x4, y4), rtol=1e-3, atol=1e-3)

    # 5) bf16 inputs: in-kernel upcast, 16-row sublane granule.
    x5 = jax.random.normal(ks[8], (2, 4, 128, 128), dtype=jnp.bfloat16)
    y5 = jax.random.normal(ks[9], (2, 4, 128, 128), dtype=jnp.bfloat16)
    out5 = l2_loss(x5, y5)
    jax.block_until_ready(out5)
    assert jnp.allclose(out5, ref_loss(x5, y5), rtol=1e-3, atol=1e-3)

    print("KERNEL_OK")
</pallas_src>

<mosaic_0001>
module attributes {stable_mosaic.version = 11 : i64} {
  func.func @_l2_partial_kernel(%arg0: i32, %arg1: i32, %arg2: memref<16x128xf32, #tpu.memory_space<vmem>>, %arg3: memref<16x128xf32, #tpu.memory_space<vmem>>, %arg4: memref<8x128xf32, #tpu.memory_space<vmem>>) attributes {dimension_semantics = [#tpu.dimension_semantics<parallel>, #tpu.dimension_semantics<arbitrary>], iteration_bounds = array<i64: 1, 1>, scalar_prefetch = 0 : i64, scratch_operands = 0 : i64, tpu.core_type = #tpu.core_type<tc>, window_params = [{transform_indices = @transform_0, window_bounds = array<i64: 16, 128>}, {transform_indices = @transform_1, window_bounds = array<i64: 16, 128>}, {transform_indices = @transform_2, window_bounds = array<i64: 8, 128>}]} {
    %c0_i32 = arith.constant 0 : i32
    %0 = arith.cmpi eq, %arg1, %c0_i32 : i32
    %1 = arith.extui %0 : i1 to i32
    %c0_i32_0 = arith.constant 0 : i32
    %2 = arith.cmpi ne, %1, %c0_i32_0 : i32
    scf.if %2 {
      %cst_8 = arith.constant 0.000000e+00 : f32
      %12 = vector.broadcast %cst_8 : f32 to vector<8x128xf32>
      %c0_9 = arith.constant 0 : index
      %c0_10 = arith.constant 0 : index
      %13 = vector.load %arg4[%c0_9, %c0_10] : memref<8x128xf32, #tpu.memory_space<vmem>>, vector<8x128xf32>
      tpu.vector_store %arg4[%c0_9, %c0_10], %12 {strides = array<i32>} : memref<8x128xf32, #tpu.memory_space<vmem>>, vector<8x128xf32>,
    } else {
    }
    %c0 = arith.constant 0 : index
    %c0_1 = arith.constant 0 : index
    %3 = vector.load %arg2[%c0, %c0_1] : memref<16x128xf32, #tpu.memory_space<vmem>>, vector<16x128xf32>
    %c0_2 = arith.constant 0 : index
    %c0_3 = arith.constant 0 : index
    %4 = vector.load %arg3[%c0_2, %c0_3] : memref<16x128xf32, #tpu.memory_space<vmem>>, vector<16x128xf32>
    %5 = arith.subf %3, %4 : vector<16x128xf32>
    %6 = arith.mulf %5, %5 : vector<16x128xf32>
    %c0_4 = arith.constant 0 : index
    %c0_5 = arith.constant 0 : index
    %7 = vector.load %arg4[%c0_4, %c0_5] : memref<8x128xf32, #tpu.memory_space<vmem>>, vector<8x128xf32>
    %8 = vector.shape_cast %6 : vector<16x128xf32> to vector<2x8x128xf32>
    %cst = arith.constant dense<0.000000e+00> : vector<8x128xf32>
    %9 = vector.multi_reduction <add>, %8, %cst [0] : vector<2x8x128xf32> to vector<8x128xf32>
    %10 = arith.addf %7, %9 : vector<8x128xf32>
    %c0_6 = arith.constant 0 : index
    %c0_7 = arith.constant 0 : index
    %11 = vector.load %arg4[%c0_6, %c0_7] : memref<8x128xf32, #tpu.memory_space<vmem>>, vector<8x128xf32>
    tpu.vector_store %arg4[%c0_6, %c0_7], %10 {strides = array<i32>} : memref<8x128xf32, #tpu.memory_space<vmem>>, vector<8x128xf32>,
    return
  }
  func.func @transform_0(%arg0: i32, %arg1: i32) -> (i32, i32) {
    %c1_i32 = arith.constant 1 : i32
    %0 = arith.muli %arg0, %c1_i32 : i32
    %1 = arith.addi %0, %arg1 : i32
    %c0_i32 = arith.constant 0 : i32
    %c0_i32_0 = arith.constant 0 : i32
    return %1, %c0_i32 : i32, i32
  }
  func.func @transform_1(%arg0: i32, %arg1: i32) -> (i32, i32) {
    %c1_i32 = arith.constant 1 : i32
    %0 = arith.muli %arg0, %c1_i32 : i32
    %1 = arith.addi %0, %arg1 : i32
    %c0_i32 = arith.constant 0 : i32
    %c0_i32_0 = arith.constant 0 : i32
    return %1, %c0_i32 : i32, i32
  }
  func.func @transform_2(%arg0: i32, %arg1: i32) -> (i32, i32) {
    %c0_i32 = arith.constant 0 : i32
    %c0_i32_0 = arith.constant 0 : i32
    return %arg0, %c0_i32 : i32, i32
  }
}

</mosaic_0001>

<llo_original>
// kernel: tpu_custom_call.1
$region0: #{tpu_custom_call.1}
  #allocation0 [shape = 'u32[]', space=smem, size = 0x4, offset = 0x4, fixed_abs, tag = 'smem constant byte address 0x4 - core index']
  #allocation1 [shape = 'u32[72,128]{1,0:T(1,128)}', space=vmem, size = 0x9000, scoped, tag = 'internal scratch']
  %s0 = inlined_call_operand.hbm [shape: f32[16,128], index: 0, kind: input, shape index: {}]
  %s1 = inlined_call_operand.hbm [shape: f32[16,128], index: 1, kind: input, shape index: {}]
  %s2 = inlined_call_operand.hbm [shape: f32[8,128], index: 2, kind: output, shape index: {}]
  %s3 = sld [smem:[#allocation0]]
  $region30: #{tpu_custom_call.1} parent=0
    _
  %s5 = ssub.s32 1, %s3
  %s6 = scalar_select 0, %s5, %s3
  $region1: #{tpu_custom_call.1} parent=0
    #allocation2 [shape = 'u8[8192]{0}', space=vmem, size = 0x2000, scoped, tag = 'input window, operand 0, single buffered']
    #allocation3 [shape = 's32[1]{0}', space=sflag, size = 0x4, scoped, tag = 'scoped memory for tpu_custom_call.1']
    #allocation4 [shape = 's32[1]{0}', space=sflag, size = 0x4, scoped, tag = 'scoped memory for tpu_custom_call.1']
    #allocation5 [shape = 'u8[8192]{0}', space=vmem, size = 0x2000, scoped, tag = 'input window, operand 1, single buffered']
    #allocation6 [shape = 's32[1]{0}', space=sflag, size = 0x4, scoped, tag = 'scoped memory for tpu_custom_call.1']
    #allocation7 [shape = 'u8[4096]{0}', space=vmem, size = 0x1000, scoped, tag = 'output window, operand 0, single buffered']
    %7 = vsyncpa [#allocation3], 0
    %8 = vsyncpa [#allocation6], 0
    %9 = vsyncpa [#allocation4], 0
    // Predicated region
    $region2: #{tpu_custom_call.1} parent=1 // pred_check
      _
    $region3: #{tpu_custom_call.1} parent=1 // pred_check_branch
      %11 = sbr.rel (0) target = $region5
    $region4: #{tpu_custom_call.1} parent=1 // pred_region
      %s12 = sadd.s32 0, 0
      %s13 = smul.u32 2, %s12
      %15 = vsyncadd [#allocation3], 0
      %s16 = smul.addr %s13, 8
      %s17 = scalar_lea.hbm %s0, %s16
      %s18 = sshll.u32 %s17, 4
      %s19 = int_to_ptr.hbm [resolvable:$true] %s18
      %s20 = sshll.u32 [#allocation2], 4
      %s21 = int_to_ptr.vmem [resolvable:$true] %s20
      %26 = dma.hbm_to_vmem [thread:$0]  %s19, 256, %s21, [#allocation3], 128, 128, 8
    $region5: #{tpu_custom_call.1} parent=1 // pred_fallthru
      _
    // Predicated region
    $region6: #{tpu_custom_call.1} parent=1 // pred_check
      _
    $region7: #{tpu_custom_call.1} parent=1 // pred_check_branch
      %28 = sbr.rel (0) target = $region9
    $region8: #{tpu_custom_call.1} parent=1 // pred_region
      %s29 = sadd.s32 0, 0
      %s30 = smul.u32 2, %s29
      %32 = vsyncadd [#allocation6], 0
      %s33 = smul.addr %s30, 8
      %s34 = scalar_lea.hbm %s1, %s33
      %s35 = sshll.u32 %s34, 4
      %s36 = int_to_ptr.hbm [resolvable:$true] %s35
      %s37 = sshll.u32 [#allocation5], 4
      %s38 = int_to_ptr.vmem [resolvable:$true] %s37
      %43 = dma.hbm_to_vmem [thread:$0]  %s36, 256, %s38, [#allocation6], 128, 128, 8
    $region9: #{tpu_custom_call.1} parent=1 // pred_fallthru
      _
    // Predicated region
    $region10: #{tpu_custom_call.1} parent=1 // pred_check
      _
    $region11: #{tpu_custom_call.1} parent=1 // pred_check_branch
      %45 = sbr.rel (0) target = $region13
    $region12: #{tpu_custom_call.1} parent=1 // pred_region
      %47 = dma.done [#allocation3], 256
    $region13: #{tpu_custom_call.1} parent=1 // pred_fallthru
      _
    // Predicated region
    $region14: #{tpu_custom_call.1} parent=1 // pred_check
      _
    $region15: #{tpu_custom_call.1} parent=1 // pred_check_branch
      %49 = sbr.rel (0) target = $region17
    $region16: #{tpu_custom_call.1} parent=1 // pred_region
      %51 = dma.done [#allocation6], 256
    $region17: #{tpu_custom_call.1} parent=1 // pred_fallthru
      _
    %s52 = sadd.s32 0, 0
    %s53 = smul.u32 2, %s52
    %s54 = sadd.s32 0, 0
    %s55 = smul.u32 2, %s54
    %p56 = scmp.eq.s32.totalorder 0, 0
    // Predicated region
    $region18: #{tpu_custom_call.1} parent=1 // pred_check
      %p57 = pneg %p56
    $region19: #{tpu_custom_call.1} parent=1 // pred_check_branch
      %59 = sbr.rel (%p57) target = $region21
    $region20: #{tpu_custom_call.1} parent=1 // pred_region
      %60 = vst [vmem:[#allocation7] sm:$0xff] 0.0
    $region21: #{tpu_custom_call.1} parent=1 // pred_fallthru
      _
    %v61 = vld [vmem:[#allocation2] sm:$0xff]
    %v62 = vld [vmem:[#allocation2 + $0x8] sm:$0xff]
    %v63 = vld [vmem:[#allocation5] sm:$0xff]
    %v64 = vld [vmem:[#allocation5 + $0x8] sm:$0xff]
    %v65 = vsub.f32 %v61, %v63
    %v66 = vsub.f32 %v62, %v64
    %v67 = vmul.f32 %v65, %v65
    %v68 = vmul.f32 %v66, %v66
    %v69 = vld [vmem:[#allocation7] sm:$0xff]
    %v70 = vadd.f32 %v67, %v68
    %v71 = vadd.f32 %v69, %v70
    %72 = vst [vmem:[#allocation7] sm:$0xff] %v71
    // Predicated region
    $region22: #{tpu_custom_call.1} parent=1 // pred_check
      _
    $region23: #{tpu_custom_call.1} parent=1 // pred_check_branch
      %74 = sbr.rel (0) target = $region25
    $region24: #{tpu_custom_call.1} parent=1 // pred_region
      %76 = vsyncadd [#allocation4], 0
      %s78 = sshll.u32 [#allocation7], 4
      %s79 = int_to_ptr.vmem [resolvable:$true] %s78
      %s80 = sshll.u32 %s2, 4
      %s81 = int_to_ptr.hbm [resolvable:$true] %s80
      %83 = dma.vmem_to_hbm [thread:$0]  %s79, 128, %s81, [#allocation4]
    $region25: #{tpu_custom_call.1} parent=1 // pred_fallthru
      _
    // Predicated region
    $region26: #{tpu_custom_call.1} parent=1 // pred_check
      _
    $region27: #{tpu_custom_call.1} parent=1 // pred_check_branch
      %85 = sbr.rel (0) target = $region29
    $region28: #{tpu_custom_call.1} parent=1 // pred_region
      %87 = dma.done [#allocation4], 128
    $region29: #{tpu_custom_call.1} parent=1 // pred_fallthru
      _
    %88 = vsyncpa [#allocation3], 1
    %89 = vsyncpa [#allocation6], 1
    %90 = vsyncpa [#allocation4], 1

</llo_original>
